<compile_context>
chip_gen: v5e
topology: v5e:2x2
jax: 0.10.0
libtpu: 0.0.40
codegen_flags: <defaults>
</compile_context>

<pallas_src>
import math
import functools

import jax
import jax.numpy as jnp
from jax.experimental import pallas as pl
from jax.experimental.pallas import tpu as pltpu


# ----------------------------- fused MHA kernel -----------------------------

def _mha_kernel(xq_ref, xk_ref, xv_ref, bias_ref, w_ref, b_ref, o_ref,
                *, heads, d_k, scale, compute_dtype):
    """One block of TB batch elements per grid step.

    xq_ref/xk_ref/xv_ref : (TB, S, d_model)   activations for this block
    bias_ref             : (TB, 1 or Sq, Sk)  additive mask bias (0 keep, -1e9 drop)
    w_ref                : (4, d_model, d_model)  stacked [Wq, Wk, Wv, Wo]
    b_ref                : (4, d_model)           stacked [bq, bk, bv, bo]
    o_ref                : (TB, Sq, d_model)  output
    """
    f32 = jnp.float32
    cd = compute_dtype

    TB, Sq, D = xq_ref.shape
    Sk = xk_ref.shape[1]

    # Fold batch into rows so each projection is ONE (TB*S, D) @ (D, D) pass.
    xq = xq_ref[...].reshape(TB * Sq, D)
    xk = xk_ref[...].reshape(TB * Sk, D)
    xv = xv_ref[...].reshape(TB * Sk, D)
    ww = w_ref[...]                                   # (4, D, D)
    bb = b_ref[...]                                   # (4, D)

    def proj(x, idx):
        return jnp.dot(x.astype(cd), ww[idx].astype(cd),
                       preferred_element_type=f32) + bb[idx:idx + 1, :]

    q = proj(xq, 0) * scale          # fold 1/sqrt(d_k) into Q once (D-wide)
    k = proj(xk, 1)
    v = proj(xv, 2)

    q3 = q.reshape(TB, Sq, D)
    k3 = k.reshape(TB, Sk, D)
    v3 = v.reshape(TB, Sk, D)

    # Hoist the mask-bias broadcast out of the head loop (no CSE of
    # broadcast_in_dim in JAX → would otherwise be emitted per head).
    bias_b = jnp.broadcast_to(bias_ref[...].astype(f32), (TB, Sq, Sk))

    # Static unrolled head loop: pure lane slices, batched (per-TB) MXU dots.
    ctx_heads = []
    for h in range(heads):
        lo = h * d_k
        qh = q3[:, :, lo:lo + d_k]                    # (TB, Sq, d_k)
        kh = k3[:, :, lo:lo + d_k]                    # (TB, Sk, d_k)
        vh = v3[:, :, lo:lo + d_k]                    # (TB, Sk, d_k)

        s = jnp.einsum("bqd,bkd->bqk", qh.astype(cd), kh.astype(cd),
                       preferred_element_type=f32)    # (TB, Sq, Sk)
        s = s + bias_b

        # numerically-stable softmax; denominator via EUP approx reciprocal
        s = s - jnp.max(s, axis=-1, keepdims=True)
        p = jnp.exp(s)
        p = p * pl.reciprocal(jnp.sum(p, axis=-1, keepdims=True), approx=True)
        # TODO(synk): attention-prob dropout omitted (eval/inference semantics).

        ctx = jnp.einsum("bqk,bkd->bqd", p.astype(cd), vh.astype(cd),
                         preferred_element_type=f32)  # (TB, Sq, d_k)
        ctx_heads.append(ctx.reshape(TB * Sq, d_k))

    # Lane-contiguous concat of head contexts, then ONE full-K Wo matmul.
    concat = jnp.concatenate(ctx_heads, axis=-1)      # (TB*Sq, D)
    out = jnp.dot(concat.astype(cd), ww[3].astype(cd),
                  preferred_element_type=f32) + bb[3:4, :]

    o_ref[...] = out.reshape(TB, Sq, D).astype(o_ref.dtype)


# ----------------------------- wrapper -----------------------------

def multi_head_attention(params, q, k, v, mask=None, *, heads,
                         compute_dtype=jnp.bfloat16):
    """Fused Pallas MultiHeadAttention forward.

    q: (B, Sq, d_model); k, v: (B, Sk, d_model)
    mask: None, or {0,1}-valued array of shape (B or 1, 1 or Sq, Sk)
          (PyTorch semantics: masked_fill(mask == 0, -1e9), broadcast over heads)
    """
    B, Sq, d_model = q.shape
    Sk = k.shape[1]
    assert d_model % heads == 0
    d_k = d_model // heads

    # Pack weights / biases: 12 operands -> 6 (fewer DMA descriptors and
    # double-buffered VMEM allocations). In production this packing would be
    # done once at parameter-load time.
    w_stack = jnp.stack([params["wq"], params["wk"], params["wv"], params["wo"]])
    b_stack = jnp.stack([params["bq"], params["bk"], params["bv"], params["bo"]])

    # Additive mask bias (0 where kept, -1e9 where masked), broadcast to full
    # batch so each grid block simply slices its own rows.
    if mask is None:
        bias = jnp.zeros((B, 1, Sk), jnp.float32)
    else:
        bias = jnp.broadcast_to((mask.astype(jnp.float32) - 1.0) * 1e9,
                                (B, mask.shape[1], Sk))
    mq = bias.shape[1]

    # Grid: fold batch into the block; keep 2 "parallel" blocks when possible
    # so v7x's two TensorCores both get work (v5e/v6e have 1 TC; 1 or 2 blocks
    # is equally fine there).
    num_blocks = 2 if (B >= 2 and B % 2 == 0) else 1
    TB = B // num_blocks

    kernel = functools.partial(
        _mha_kernel, heads=heads, d_k=d_k,
        scale=1.0 / math.sqrt(d_k), compute_dtype=compute_dtype)

    return pl.pallas_call(
        kernel,
        out_shape=jax.ShapeDtypeStruct((B, Sq, d_model), jnp.float32),
        grid=(num_blocks,),
        in_specs=[
            pl.BlockSpec((TB, Sq, d_model), lambda i: (i, 0, 0)),     # q
            pl.BlockSpec((TB, Sk, d_model), lambda i: (i, 0, 0)),     # k
            pl.BlockSpec((TB, Sk, d_model), lambda i: (i, 0, 0)),     # v
            pl.BlockSpec((TB, mq, Sk), lambda i: (i, 0, 0)),          # mask bias
            pl.BlockSpec((4, d_model, d_model), lambda i: (0, 0, 0)),  # W stack
            pl.BlockSpec((4, d_model), lambda i: (0, 0)),              # b stack
        ],
        out_specs=pl.BlockSpec((TB, Sq, d_model), lambda i: (i, 0, 0)),
        compiler_params=pltpu.CompilerParams(
            dimension_semantics=("parallel",)),
    )(q, k, v, bias, w_stack, b_stack)


# ----------------------------- plain-JAX reference -----------------------------

def mha_reference(params, q, k, v, mask, heads):
    B, Sq, d_model = q.shape
    d_k = d_model // heads
    lin = lambda x, w, b: x @ w + b
    qp = lin(q, params["wq"], params["bq"]).reshape(B, Sq, heads, d_k).transpose(0, 2, 1, 3)
    kp = lin(k, params["wk"], params["bk"]).reshape(B, -1, heads, d_k).transpose(0, 2, 1, 3)
    vp = lin(v, params["wv"], params["bv"]).reshape(B, -1, heads, d_k).transpose(0, 2, 1, 3)
    s = jnp.einsum("bhqd,bhkd->bhqk", qp, kp) / math.sqrt(d_k)
    if mask is not None:
        s = jnp.where(mask[:, None] == 0, -1e9, s)        # mask.unsqueeze(1)
    p = jax.nn.softmax(s, axis=-1)
    ctx = jnp.einsum("bhqk,bhkd->bhqd", p, vp)
    concat = ctx.transpose(0, 2, 1, 3).reshape(B, Sq, d_model)
    return concat @ params["wo"] + params["bo"]


# ----------------------------- deterministic parameter init -----------------------------

def init_mha(key, d_model):
    keys = jax.random.split(key, 4)
    p = {}
    for name, kk in zip(("q", "k", "v", "o"), keys):
        kw, kb = jax.random.split(kk)
        p["w" + name] = jax.random.normal(kw, (d_model, d_model), jnp.float32) / math.sqrt(d_model)
        p["b" + name] = jax.random.normal(kb, (d_model,), jnp.float32) * 0.01
    return p


# ----------------------------- main -----------------------------

if __name__ == "__main__":
    B, S, d_model, heads = 2, 8, 32, 4

    key = jax.random.PRNGKey(0)
    kp, kq, kk, kv = jax.random.split(key, 4)
    params = init_mha(kp, d_model)

    q = jax.random.normal(kq, (B, S, d_model), jnp.float32)
    k = jax.random.normal(kk, (B, S, d_model), jnp.float32)
    v = jax.random.normal(kv, (B, S, d_model), jnp.float32)

    # Padding-style mask (B, 1, S): last two key positions masked out.
    mask = jnp.ones((B, 1, S), jnp.float32).at[:, :, -2:].set(0.0)

    ref = mha_reference(params, q, k, v, mask, heads)

    # Default path: bf16 MXU operands, f32 accumulation.
    out = multi_head_attention(params, q, k, v, mask, heads=heads)
    out = jax.block_until_ready(out)
    assert out.shape == (B, S, d_model), out.shape
    assert bool(jnp.all(jnp.isfinite(out)))
    err_bf16 = float(jnp.max(jnp.abs(out - ref)))
    assert bool(jnp.allclose(out, ref, rtol=1e-1, atol=1e-1)), err_bf16

    # Full-precision path for tight numerical parity with the reference.
    out_f32 = multi_head_attention(params, q, k, v, mask, heads=heads,
                                   compute_dtype=jnp.float32)
    out_f32 = jax.block_until_ready(out_f32)
    err_f32 = float(jnp.max(jnp.abs(out_f32 - ref)))
    assert bool(jnp.allclose(out_f32, ref, rtol=2e-2, atol=2e-3)), err_f32

    print("KERNEL_OK")
</pallas_src>

<mosaic_0001>
module attributes {stable_mosaic.version = 11 : i64} {
  func.func @_mha_kernel(%arg0: i32, %arg1: memref<1x8x32xf32, #tpu.memory_space<vmem>>, %arg2: memref<1x8x32xf32, #tpu.memory_space<vmem>>, %arg3: memref<1x8x32xf32, #tpu.memory_space<vmem>>, %arg4: memref<1x1x8xf32, #tpu.memory_space<vmem>>, %arg5: memref<4x32x32xf32, #tpu.memory_space<vmem>>, %arg6: memref<4x32xf32, #tpu.memory_space<vmem>>, %arg7: memref<1x8x32xf32, #tpu.memory_space<vmem>>) attributes {dimension_semantics = [#tpu.dimension_semantics<parallel>], iteration_bounds = array<i64: 2>, scalar_prefetch = 0 : i64, scratch_operands = 0 : i64, tpu.core_type = #tpu.core_type<tc>, window_params = [{transform_indices = @transform_0, window_bounds = array<i64: 1, 8, 32>}, {transform_indices = @transform_1, window_bounds = array<i64: 1, 8, 32>}, {transform_indices = @transform_2, window_bounds = array<i64: 1, 8, 32>}, {transform_indices = @transform_3, window_bounds = array<i64: 1, 1, 8>}, {pipeline_mode = #tpu.pipeline_mode<synchronous>, transform_indices = @transform_4, window_bounds = array<i64: 4, 32, 32>}, {pipeline_mode = #tpu.pipeline_mode<synchronous>, transform_indices = @transform_5, window_bounds = array<i64: 4, 32>}, {transform_indices = @transform_6, window_bounds = array<i64: 1, 8, 32>}]} {
    %c0 = arith.constant 0 : index
    %c0_0 = arith.constant 0 : index
    %c0_1 = arith.constant 0 : index
    %0 = vector.load %arg1[%c0, %c0_0, %c0_1] : memref<1x8x32xf32, #tpu.memory_space<vmem>>, vector<1x8x32xf32>
    %1 = vector.shape_cast %0 : vector<1x8x32xf32> to vector<8x32xf32>
    %c0_2 = arith.constant 0 : index
    %c0_3 = arith.constant 0 : index
    %c0_4 = arith.constant 0 : index
    %2 = vector.load %arg2[%c0_2, %c0_3, %c0_4] : memref<1x8x32xf32, #tpu.memory_space<vmem>>, vector<1x8x32xf32>
    %3 = vector.shape_cast %2 : vector<1x8x32xf32> to vector<8x32xf32>
    %c0_5 = arith.constant 0 : index
    %c0_6 = arith.constant 0 : index
    %c0_7 = arith.constant 0 : index
    %4 = vector.load %arg3[%c0_5, %c0_6, %c0_7] : memref<1x8x32xf32, #tpu.memory_space<vmem>>, vector<1x8x32xf32>
    %5 = vector.shape_cast %4 : vector<1x8x32xf32> to vector<8x32xf32>
    %c0_8 = arith.constant 0 : index
    %c0_9 = arith.constant 0 : index
    %c0_10 = arith.constant 0 : index
    %6 = vector.load %arg5[%c0_8, %c0_9, %c0_10] : memref<4x32x32xf32, #tpu.memory_space<vmem>>, vector<4x32x32xf32>
    %c0_11 = arith.constant 0 : index
    %c0_12 = arith.constant 0 : index
    %7 = vector.load %arg6[%c0_11, %c0_12] : memref<4x32xf32, #tpu.memory_space<vmem>>, vector<4x32xf32>
    %8 = arith.truncf %1 : vector<8x32xf32> to vector<8x32xbf16>
    %9 = vector.extract_strided_slice %6 {offsets = [0, 0, 0], sizes = [1, 32, 32], strides = [1, 1, 1]} : vector<4x32x32xf32> to vector<1x32x32xf32>
    %10 = vector.shape_cast %9 : vector<1x32x32xf32> to vector<32x32xf32>
    %11 = arith.truncf %10 : vector<32x32xf32> to vector<32x32xbf16>
    %cst = arith.constant dense<0.000000e+00> : vector<8x32xf32>
    %12 = tpu.matmul %8, %11, %cst {dimension_numbers = #tpu.dot_dimension_numbers<[1], [0], [0], [1], [0, 0, 1, 1], [], []>} : vector<8x32xbf16>, vector<32x32xbf16>, vector<8x32xf32> -> vector<8x32xf32>
    %13 = vector.extract_strided_slice %7 {offsets = [0, 0], sizes = [1, 32], strides = [1, 1]} : vector<4x32xf32> to vector<1x32xf32>
    %14 = vector.broadcast %13 : vector<1x32xf32> to vector<8x32xf32>
    %15 = arith.addf %12, %14 : vector<8x32xf32>
    %cst_13 = arith.constant 0.353553385 : f32
    %16 = vector.broadcast %cst_13 : f32 to vector<8x32xf32>
    %17 = arith.mulf %15, %16 : vector<8x32xf32>
    %18 = arith.truncf %3 : vector<8x32xf32> to vector<8x32xbf16>
    %19 = vector.extract_strided_slice %6 {offsets = [1, 0, 0], sizes = [1, 32, 32], strides = [1, 1, 1]} : vector<4x32x32xf32> to vector<1x32x32xf32>
    %20 = vector.shape_cast %19 : vector<1x32x32xf32> to vector<32x32xf32>
    %21 = arith.truncf %20 : vector<32x32xf32> to vector<32x32xbf16>
    %cst_14 = arith.constant dense<0.000000e+00> : vector<8x32xf32>
    %22 = tpu.matmul %18, %21, %cst_14 {dimension_numbers = #tpu.dot_dimension_numbers<[1], [0], [0], [1], [0, 0, 1, 1], [], []>} : vector<8x32xbf16>, vector<32x32xbf16>, vector<8x32xf32> -> vector<8x32xf32>
    %23 = vector.extract_strided_slice %7 {offsets = [1, 0], sizes = [1, 32], strides = [1, 1]} : vector<4x32xf32> to vector<1x32xf32>
    %24 = vector.broadcast %23 : vector<1x32xf32> to vector<8x32xf32>
    %25 = arith.addf %22, %24 : vector<8x32xf32>
    %26 = arith.truncf %5 : vector<8x32xf32> to vector<8x32xbf16>
    %27 = vector.extract_strided_slice %6 {offsets = [2, 0, 0], sizes = [1, 32, 32], strides = [1, 1, 1]} : vector<4x32x32xf32> to vector<1x32x32xf32>
    %28 = vector.shape_cast %27 : vector<1x32x32xf32> to vector<32x32xf32>
    %29 = arith.truncf %28 : vector<32x32xf32> to vector<32x32xbf16>
    %cst_15 = arith.constant dense<0.000000e+00> : vector<8x32xf32>
    %30 = tpu.matmul %26, %29, %cst_15 {dimension_numbers = #tpu.dot_dimension_numbers<[1], [0], [0], [1], [0, 0, 1, 1], [], []>} : vector<8x32xbf16>, vector<32x32xbf16>, vector<8x32xf32> -> vector<8x32xf32>
    %31 = vector.extract_strided_slice %7 {offsets = [2, 0], sizes = [1, 32], strides = [1, 1]} : vector<4x32xf32> to vector<1x32xf32>
    %32 = vector.broadcast %31 : vector<1x32xf32> to vector<8x32xf32>
    %33 = arith.addf %30, %32 : vector<8x32xf32>
    %34 = vector.shape_cast %17 : vector<8x32xf32> to vector<1x8x32xf32>
    %35 = vector.shape_cast %25 : vector<8x32xf32> to vector<1x8x32xf32>
    %36 = vector.shape_cast %33 : vector<8x32xf32> to vector<1x8x32xf32>
    %c0_16 = arith.constant 0 : index
    %c0_17 = arith.constant 0 : index
    %c0_18 = arith.constant 0 : index
    %37 = vector.load %arg4[%c0_16, %c0_17, %c0_18] : memref<1x1x8xf32, #tpu.memory_space<vmem>>, vector<1x1x8xf32>
    %38 = vector.shape_cast %37 : vector<1x1x8xf32> to vector<1x1x8xf32>
    %39 = vector.broadcast %38 : vector<1x1x8xf32> to vector<1x8x8xf32>
    %40 = vector.extract_strided_slice %34 {offsets = [0, 0, 0], sizes = [1, 8, 8], strides = [1, 1, 1]} : vector<1x8x32xf32> to vector<1x8x8xf32>
    %41 = vector.extract_strided_slice %35 {offsets = [0, 0, 0], sizes = [1, 8, 8], strides = [1, 1, 1]} : vector<1x8x32xf32> to vector<1x8x8xf32>
    %42 = vector.extract_strided_slice %36 {offsets = [0, 0, 0], sizes = [1, 8, 8], strides = [1, 1, 1]} : vector<1x8x32xf32> to vector<1x8x8xf32>
    %43 = arith.truncf %40 : vector<1x8x8xf32> to vector<1x8x8xbf16>
    %44 = arith.truncf %41 : vector<1x8x8xf32> to vector<1x8x8xbf16>
    "tpu.trace_start"() <{level = 10 : i32, message = "bqd,bkd->bqk"}> : () -> ()
    %cst_19 = arith.constant dense<0.000000e+00> : vector<1x8x8xf32>
    %45 = tpu.matmul %43, %44, %cst_19 {dimension_numbers = #tpu.dot_dimension_numbers<[2], [2], [1], [1], [0, 0, 0, 1, 1, 1], [0], [0]>} : vector<1x8x8xbf16>, vector<1x8x8xbf16>, vector<1x8x8xf32> -> vector<1x8x8xf32>
    "tpu.trace_stop"() : () -> ()
    %46 = arith.addf %45, %39 : vector<1x8x8xf32>
    %cst_20 = arith.constant dense<0xFF800000> : vector<1x8xf32>
    %47 = vector.multi_reduction <maximumf>, %46, %cst_20 [2] : vector<1x8x8xf32> to vector<1x8xf32>
    %48 = vector.shape_cast %47 : vector<1x8xf32> to vector<1x8x1xf32>
    %49 = vector.broadcast %48 : vector<1x8x1xf32> to vector<1x8x8xf32>
    %50 = arith.subf %46, %49 : vector<1x8x8xf32>
    %51 = math.exp %50 : vector<1x8x8xf32>
    %cst_21 = arith.constant dense<0.000000e+00> : vector<1x8xf32>
    %52 = vector.multi_reduction <add>, %51, %cst_21 [2] : vector<1x8x8xf32> to vector<1x8xf32>
    %53 = vector.shape_cast %52 : vector<1x8xf32> to vector<1x8x1xf32>
    %54 = tpu.reciprocal %53 {approx = true} : vector<1x8x1xf32> -> vector<1x8x1xf32>
    %55 = vector.broadcast %54 : vector<1x8x1xf32> to vector<1x8x8xf32>
    %56 = arith.mulf %51, %55 : vector<1x8x8xf32>
    %57 = arith.truncf %56 : vector<1x8x8xf32> to vector<1x8x8xbf16>
    %58 = arith.truncf %42 : vector<1x8x8xf32> to vector<1x8x8xbf16>
    "tpu.trace_start"() <{level = 10 : i32, message = "bqk,bkd->bqd"}> : () -> ()
    %cst_22 = arith.constant dense<0.000000e+00> : vector<1x8x8xf32>
    %59 = tpu.matmul %57, %58, %cst_22 {dimension_numbers = #tpu.dot_dimension_numbers<[2], [1], [1], [2], [0, 0, 0, 1, 1, 2], [0], [0]>} : vector<1x8x8xbf16>, vector<1x8x8xbf16>, vector<1x8x8xf32> -> vector<1x8x8xf32>
    "tpu.trace_stop"() : () -> ()
    %60 = vector.shape_cast %59 : vector<1x8x8xf32> to vector<8x8xf32>
    %61 = vector.extract_strided_slice %34 {offsets = [0, 0, 8], sizes = [1, 8, 8], strides = [1, 1, 1]} : vector<1x8x32xf32> to vector<1x8x8xf32>
    %62 = vector.extract_strided_slice %35 {offsets = [0, 0, 8], sizes = [1, 8, 8], strides = [1, 1, 1]} : vector<1x8x32xf32> to vector<1x8x8xf32>
    %63 = vector.extract_strided_slice %36 {offsets = [0, 0, 8], sizes = [1, 8, 8], strides = [1, 1, 1]} : vector<1x8x32xf32> to vector<1x8x8xf32>
    %64 = arith.truncf %61 : vector<1x8x8xf32> to vector<1x8x8xbf16>
    %65 = arith.truncf %62 : vector<1x8x8xf32> to vector<1x8x8xbf16>
    "tpu.trace_start"() <{level = 10 : i32, message = "bqd,bkd->bqk"}> : () -> ()
    %cst_23 = arith.constant dense<0.000000e+00> : vector<1x8x8xf32>
    %66 = tpu.matmul %64, %65, %cst_23 {dimension_numbers = #tpu.dot_dimension_numbers<[2], [2], [1], [1], [0, 0, 0, 1, 1, 1], [0], [0]>} : vector<1x8x8xbf16>, vector<1x8x8xbf16>, vector<1x8x8xf32> -> vector<1x8x8xf32>
    "tpu.trace_stop"() : () -> ()
    %67 = arith.addf %66, %39 : vector<1x8x8xf32>
    %cst_24 = arith.constant dense<0xFF800000> : vector<1x8xf32>
    %68 = vector.multi_reduction <maximumf>, %67, %cst_24 [2] : vector<1x8x8xf32> to vector<1x8xf32>
    %69 = vector.shape_cast %68 : vector<1x8xf32> to vector<1x8x1xf32>
    %70 = vector.broadcast %69 : vector<1x8x1xf32> to vector<1x8x8xf32>
    %71 = arith.subf %67, %70 : vector<1x8x8xf32>
    %72 = math.exp %71 : vector<1x8x8xf32>
    %cst_25 = arith.constant dense<0.000000e+00> : vector<1x8xf32>
    %73 = vector.multi_reduction <add>, %72, %cst_25 [2] : vector<1x8x8xf32> to vector<1x8xf32>
    %74 = vector.shape_cast %73 : vector<1x8xf32> to vector<1x8x1xf32>
    %75 = tpu.reciprocal %74 {approx = true} : vector<1x8x1xf32> -> vector<1x8x1xf32>
    %76 = vector.broadcast %75 : vector<1x8x1xf32> to vector<1x8x8xf32>
    %77 = arith.mulf %72, %76 : vector<1x8x8xf32>
    %78 = arith.truncf %77 : vector<1x8x8xf32> to vector<1x8x8xbf16>
    %79 = arith.truncf %63 : vector<1x8x8xf32> to vector<1x8x8xbf16>
    "tpu.trace_start"() <{level = 10 : i32, message = "bqk,bkd->bqd"}> : () -> ()
    %cst_26 = arith.constant dense<0.000000e+00> : vector<1x8x8xf32>
    %80 = tpu.matmul %78, %79, %cst_26 {dimension_numbers = #tpu.dot_dimension_numbers<[2], [1], [1], [2], [0, 0, 0, 1, 1, 2], [0], [0]>} : vector<1x8x8xbf16>, vector<1x8x8xbf16>, vector<1x8x8xf32> -> vector<1x8x8xf32>
    "tpu.trace_stop"() : () -> ()
    %81 = vector.shape_cast %80 : vector<1x8x8xf32> to vector<8x8xf32>
    %82 = vector.extract_strided_slice %34 {offsets = [0, 0, 16], sizes = [1, 8, 8], strides = [1, 1, 1]} : vector<1x8x32xf32> to vector<1x8x8xf32>
    %83 = vector.extract_strided_slice %35 {offsets = [0, 0, 16], sizes = [1, 8, 8], strides = [1, 1, 1]} : vector<1x8x32xf32> to vector<1x8x8xf32>
    %84 = vector.extract_strided_slice %36 {offsets = [0, 0, 16], sizes = [1, 8, 8], strides = [1, 1, 1]} : vector<1x8x32xf32> to vector<1x8x8xf32>
    %85 = arith.truncf %82 : vector<1x8x8xf32> to vector<1x8x8xbf16>
    %86 = arith.truncf %83 : vector<1x8x8xf32> to vector<1x8x8xbf16>
    "tpu.trace_start"() <{level = 10 : i32, message = "bqd,bkd->bqk"}> : () -> ()
    %cst_27 = arith.constant dense<0.000000e+00> : vector<1x8x8xf32>
    %87 = tpu.matmul %85, %86, %cst_27 {dimension_numbers = #tpu.dot_dimension_numbers<[2], [2], [1], [1], [0, 0, 0, 1, 1, 1], [0], [0]>} : vector<1x8x8xbf16>, vector<1x8x8xbf16>, vector<1x8x8xf32> -> vector<1x8x8xf32>
    "tpu.trace_stop"() : () -> ()
    %88 = arith.addf %87, %39 : vector<1x8x8xf32>
    %cst_28 = arith.constant dense<0xFF800000> : vector<1x8xf32>
    %89 = vector.multi_reduction <maximumf>, %88, %cst_28 [2] : vector<1x8x8xf32> to vector<1x8xf32>
    %90 = vector.shape_cast %89 : vector<1x8xf32> to vector<1x8x1xf32>
    %91 = vector.broadcast %90 : vector<1x8x1xf32> to vector<1x8x8xf32>
    %92 = arith.subf %88, %91 : vector<1x8x8xf32>
    %93 = math.exp %92 : vector<1x8x8xf32>
    %cst_29 = arith.constant dense<0.000000e+00> : vector<1x8xf32>
    %94 = vector.multi_reduction <add>, %93, %cst_29 [2] : vector<1x8x8xf32> to vector<1x8xf32>
    %95 = vector.shape_cast %94 : vector<1x8xf32> to vector<1x8x1xf32>
    %96 = tpu.reciprocal %95 {approx = true} : vector<1x8x1xf32> -> vector<1x8x1xf32>
    %97 = vector.broadcast %96 : vector<1x8x1xf32> to vector<1x8x8xf32>
    %98 = arith.mulf %93, %97 : vector<1x8x8xf32>
    %99 = arith.truncf %98 : vector<1x8x8xf32> to vector<1x8x8xbf16>
    %100 = arith.truncf %84 : vector<1x8x8xf32> to vector<1x8x8xbf16>
    "tpu.trace_start"() <{level = 10 : i32, message = "bqk,bkd->bqd"}> : () -> ()
    %cst_30 = arith.constant dense<0.000000e+00> : vector<1x8x8xf32>
    %101 = tpu.matmul %99, %100, %cst_30 {dimension_numbers = #tpu.dot_dimension_numbers<[2], [1], [1], [2], [0, 0, 0, 1, 1, 2], [0], [0]>} : vector<1x8x8xbf16>, vector<1x8x8xbf16>, vector<1x8x8xf32> -> vector<1x8x8xf32>
    "tpu.trace_stop"() : () -> ()
    %102 = vector.shape_cast %101 : vector<1x8x8xf32> to vector<8x8xf32>
    %103 = vector.extract_strided_slice %34 {offsets = [0, 0, 24], sizes = [1, 8, 8], strides = [1, 1, 1]} : vector<1x8x32xf32> to vector<1x8x8xf32>
    %104 = vector.extract_strided_slice %35 {offsets = [0, 0, 24], sizes = [1, 8, 8], strides = [1, 1, 1]} : vector<1x8x32xf32> to vector<1x8x8xf32>
    %105 = vector.extract_strided_slice %36 {offsets = [0, 0, 24], sizes = [1, 8, 8], strides = [1, 1, 1]} : vector<1x8x32xf32> to vector<1x8x8xf32>
    %106 = arith.truncf %103 : vector<1x8x8xf32> to vector<1x8x8xbf16>
    %107 = arith.truncf %104 : vector<1x8x8xf32> to vector<1x8x8xbf16>
    "tpu.trace_start"() <{level = 10 : i32, message = "bqd,bkd->bqk"}> : () -> ()
    %cst_31 = arith.constant dense<0.000000e+00> : vector<1x8x8xf32>
    %108 = tpu.matmul %106, %107, %cst_31 {dimension_numbers = #tpu.dot_dimension_numbers<[2], [2], [1], [1], [0, 0, 0, 1, 1, 1], [0], [0]>} : vector<1x8x8xbf16>, vector<1x8x8xbf16>, vector<1x8x8xf32> -> vector<1x8x8xf32>
    "tpu.trace_stop"() : () -> ()
    %109 = arith.addf %108, %39 : vector<1x8x8xf32>
    %cst_32 = arith.constant dense<0xFF800000> : vector<1x8xf32>
    %110 = vector.multi_reduction <maximumf>, %109, %cst_32 [2] : vector<1x8x8xf32> to vector<1x8xf32>
    %111 = vector.shape_cast %110 : vector<1x8xf32> to vector<1x8x1xf32>
    %112 = vector.broadcast %111 : vector<1x8x1xf32> to vector<1x8x8xf32>
    %113 = arith.subf %109, %112 : vector<1x8x8xf32>
    %114 = math.exp %113 : vector<1x8x8xf32>
    %cst_33 = arith.constant dense<0.000000e+00> : vector<1x8xf32>
    %115 = vector.multi_reduction <add>, %114, %cst_33 [2] : vector<1x8x8xf32> to vector<1x8xf32>
    %116 = vector.shape_cast %115 : vector<1x8xf32> to vector<1x8x1xf32>
    %117 = tpu.reciprocal %116 {approx = true} : vector<1x8x1xf32> -> vector<1x8x1xf32>
    %118 = vector.broadcast %117 : vector<1x8x1xf32> to vector<1x8x8xf32>
    %119 = arith.mulf %114, %118 : vector<1x8x8xf32>
    %120 = arith.truncf %119 : vector<1x8x8xf32> to vector<1x8x8xbf16>
    %121 = arith.truncf %105 : vector<1x8x8xf32> to vector<1x8x8xbf16>
    "tpu.trace_start"() <{level = 10 : i32, message = "bqk,bkd->bqd"}> : () -> ()
    %cst_34 = arith.constant dense<0.000000e+00> : vector<1x8x8xf32>
    %122 = tpu.matmul %120, %121, %cst_34 {dimension_numbers = #tpu.dot_dimension_numbers<[2], [1], [1], [2], [0, 0, 0, 1, 1, 2], [0], [0]>} : vector<1x8x8xbf16>, vector<1x8x8xbf16>, vector<1x8x8xf32> -> vector<1x8x8xf32>
    "tpu.trace_stop"() : () -> ()
    %123 = vector.shape_cast %122 : vector<1x8x8xf32> to vector<8x8xf32>
    %124 = tpu.concatenate %60, %81, %102, %123 in 1 : vector<8x8xf32>, vector<8x8xf32>, vector<8x8xf32>, vector<8x8xf32> -> vector<8x32xf32>
    %125 = arith.truncf %124 : vector<8x32xf32> to vector<8x32xbf16>
    %126 = vector.extract_strided_slice %6 {offsets = [3, 0, 0], sizes = [1, 32, 32], strides = [1, 1, 1]} : vector<4x32x32xf32> to vector<1x32x32xf32>
    %127 = vector.shape_cast %126 : vector<1x32x32xf32> to vector<32x32xf32>
    %128 = arith.truncf %127 : vector<32x32xf32> to vector<32x32xbf16>
    %cst_35 = arith.constant dense<0.000000e+00> : vector<8x32xf32>
    %129 = tpu.matmul %125, %128, %cst_35 {dimension_numbers = #tpu.dot_dimension_numbers<[1], [0], [0], [1], [0, 0, 1, 1], [], []>} : vector<8x32xbf16>, vector<32x32xbf16>, vector<8x32xf32> -> vector<8x32xf32>
    %130 = vector.extract_strided_slice %7 {offsets = [3, 0], sizes = [1, 32], strides = [1, 1]} : vector<4x32xf32> to vector<1x32xf32>
    %131 = vector.broadcast %130 : vector<1x32xf32> to vector<8x32xf32>
    %132 = arith.addf %129, %131 : vector<8x32xf32>
    %133 = vector.shape_cast %132 : vector<8x32xf32> to vector<1x8x32xf32>
    %c0_36 = arith.constant 0 : index
    %c0_37 = arith.constant 0 : index
    %c0_38 = arith.constant 0 : index
    %134 = vector.load %arg7[%c0_36, %c0_37, %c0_38] : memref<1x8x32xf32, #tpu.memory_space<vmem>>, vector<1x8x32xf32>
    tpu.vector_store %arg7[%c0_36, %c0_37, %c0_38], %133 {strides = array<i32>} : memref<1x8x32xf32, #tpu.memory_space<vmem>>, vector<1x8x32xf32>,
    return
  }
  func.func @transform_0(%arg0: i32) -> (i32, i32, i32) {
    %c0_i32 = arith.constant 0 : i32
    %c0_i32_0 = arith.constant 0 : i32
    %c0_i32_1 = arith.constant 0 : i32
    return %arg0, %c0_i32, %c0_i32_0 : i32, i32, i32
  }
  func.func @transform_1(%arg0: i32) -> (i32, i32, i32) {
    %c0_i32 = arith.constant 0 : i32
    %c0_i32_0 = arith.constant 0 : i32
    %c0_i32_1 = arith.constant 0 : i32
    return %arg0, %c0_i32, %c0_i32_0 : i32, i32, i32
  }
  func.func @transform_2(%arg0: i32) -> (i32, i32, i32) {
    %c0_i32 = arith.constant 0 : i32
    %c0_i32_0 = arith.constant 0 : i32
    %c0_i32_1 = arith.constant 0 : i32
    return %arg0, %c0_i32, %c0_i32_0 : i32, i32, i32
  }
  func.func @transform_3(%arg0: i32) -> (i32, i32, i32) {
    %c0_i32 = arith.constant 0 : i32
    %c0_i32_0 = arith.constant 0 : i32
    %c0_i32_1 = arith.constant 0 : i32
    return %arg0, %c0_i32, %c0_i32_0 : i32, i32, i32
  }
  func.func @transform_4(%arg0: i32) -> (i32, i32, i32) {
    %c0_i32 = arith.constant 0 : i32
    %c0_i32_0 = arith.constant 0 : i32
    %c0_i32_1 = arith.constant 0 : i32
    %c0_i32_2 = arith.constant 0 : i32
    return %c0_i32, %c0_i32_0, %c0_i32_1 : i32, i32, i32
  }
  func.func @transform_5(%arg0: i32) -> (i32, i32) {
    %c0_i32 = arith.constant 0 : i32
    %c0_i32_0 = arith.constant 0 : i32
    %c0_i32_1 = arith.constant 0 : i32
    return %c0_i32, %c0_i32_0 : i32, i32
  }
  func.func @transform_6(%arg0: i32) -> (i32, i32, i32) {
    %c0_i32 = arith.constant 0 : i32
    %c0_i32_0 = arith.constant 0 : i32
    %c0_i32_1 = arith.constant 0 : i32
    return %arg0, %c0_i32, %c0_i32_0 : i32, i32, i32
  }
}

</mosaic_0001>

<llo_original>
// kernel: tpu_custom_call.1
$region0: #{tpu_custom_call.1}
  #allocation0 [shape = 'u32[]', space=smem, size = 0x4, offset = 0x4, fixed_abs, tag = 'smem constant byte address 0x4 - core index']
  #allocation1 [shape = 'u32[72,128]{1,0:T(1,128)}', space=vmem, size = 0x9000, scoped, tag = 'internal scratch']
  %s0 = inlined_call_operand.hbm [shape: f32[2,8,32], index: 0, kind: input, shape index: {}]
  %s1 = inlined_call_operand.hbm [shape: f32[2,8,32], index: 1, kind: input, shape index: {}]
  %s2 = inlined_call_operand.hbm [shape: f32[2,8,32], index: 2, kind: input, shape index: {}]
  %s3 = inlined_call_operand.hbm [shape: f32[2,1,8], index: 3, kind: input, shape index: {}]
  %s4 = inlined_call_operand.hbm [shape: f32[4,32,32], index: 4, kind: input, shape index: {}]
  %s5 = inlined_call_operand.vmem [shape: f32[4,32], index: 5, kind: input, shape index: {}]
  %s6 = inlined_call_operand.hbm [shape: f32[2,8,32], index: 6, kind: output, shape index: {}]
  %s7 = sld [smem:[#allocation0]]
  $region77: #{tpu_custom_call.1} parent=0
    _
  %s9 = ssub.s32 1, %s7
  %s10 = scalar_select 0, %s9, %s7
  $region1: #{tpu_custom_call.1} parent=0
    #allocation2 [shape = 'u8[8192]{0}', space=vmem, size = 0x2000, scoped, tag = 'input window, operand 0']
    #allocation3 [shape = 's32[2]{0}', space=sflag, size = 0x8, scoped, tag = 'scoped memory for tpu_custom_call.1']
    #allocation4 [shape = 's32[2]{0}', space=sflag, size = 0x8, scoped, tag = 'scoped memory for tpu_custom_call.1']
    #allocation5 [shape = 'u8[8192]{0}', space=vmem, size = 0x2000, scoped, tag = 'input window, operand 1']
    #allocation6 [shape = 's32[2]{0}', space=sflag, size = 0x8, scoped, tag = 'scoped memory for tpu_custom_call.1']
    #allocation7 [shape = 'u8[8192]{0}', space=vmem, size = 0x2000, scoped, tag = 'input window, operand 2']
    #allocation8 [shape = 'u8[1024]{0}', space=vmem, size = 0x400, scoped, tag = 'input window, operand 3']
    #allocation9 [shape = 's32[2]{0}', space=sflag, size = 0x8, scoped, tag = 'scoped memory for tpu_custom_call.1']
    #allocation10 [shape = 'u8[65536]{0}', space=vmem, size = 0x10000, scoped, tag = 'input window, operand 4, single buffered']
    #allocation11 [shape = 'u8[8192]{0}', space=vmem, size = 0x2000, scoped, tag = 'output window, operand 0']
    %11 = vsyncpa [#allocation3], 0
    %s12 = scalar_lea.sflag [#allocation3], 1
    %13 = vsyncpa %s12, 0
    %14 = vsyncpa [#allocation6], 0
    %s15 = scalar_lea.sflag [#allocation6], 1
    %16 = vsyncpa %s15, 0
    %17 = vsyncpa [#allocation9], 0
    %s18 = scalar_lea.sflag [#allocation9], 1
    %19 = vsyncpa %s18, 0
    %20 = vsyncpa [#allocation4], 0
    %s21 = scalar_lea.sflag [#allocation4], 1
    %22 = vsyncpa %s21, 0
    loop: start=0, step=1, limit=4
    $region2: #{tpu_custom_call.1} parent=1 // loop_pre_header
      _
    $region3: #{tpu_custom_call.1} parent=1 // loop_header
      %s24 = sphi 0, %s28
      %p25 = scmp.ge.s32.totalorder %s24, 4
      %s34 = sphi 0, %s36
      %s37 = sphi 0, %s34
      %s38 = sphi 0, %s37
      %s54 = sphi 0, %s38
      %s60 = sphi 0, %s62
      %s63 = sphi 0, %s60
      %s64 = sphi 0, %s63
      %s80 = sphi 0, %s64
      %s86 = sphi 0, %s88
      %s89 = sphi 0, %s86
      %s90 = sphi 0, %s89
      %s106 = sphi 0, %s90
      %s112 = sphi 0, %s114
      %s115 = sphi 0, %s112
      %s116 = sphi 0, %s115
      %s132 = sphi 0, %s116
      %s136 = sphi 0, %s136
      %s138 = sphi 0, %s136
      %s139 = sphi 0, %s138
      %s153 = sphi 0, %s139
      %s157 = sphi 0, %s157
      %s159 = sphi 0, %s157
      %s160 = sphi 0, %s159
      %s174 = sphi 0, %s160
      %s180 = sphi 0, %s182
      %s183 = sphi 0, %s180
      %s184 = sphi 0, %s183
      %s200 = sphi 0, %s184
    $region4: #{tpu_custom_call.1} parent=1 // loop_header_branch
      %27 = sbr.rel (%p25) target = $region8
    $region5: #{tpu_custom_call.1} parent=1 // loop_body
      %s29 = ssub.s32 %s24, 1
      %s30 = ssub.s32 %s24, 2
      %s31 = sadd.s32 %s24, 1
      %s32 = ssub.s32 %s24, %s31
      %p33 = scmp.eq.s32.totalorder %s32, 0
      %s35 = sadd.s32 %s34, 1
      %s36 = scalar_select %p33, %s34, %s35
      %p39 = pneg %p33
      %p40 = scmp.eq.s32.totalorder %s24, 1
      %p41 = por %p39, %p40
      %p42 = scmp.ne.s32.totalorder %s34, %s37
      %p43 = scmp.eq.s32.totalorder %s24, 0
      %p44 = por %p42, %p43
      %p45 = scmp.ne.s32.totalorder %s34, %s37
      %p46 = scmp.eq.s32.totalorder %s29, 1
      %p47 = por %p45, %p46
      %p48 = scmp.ne.s32.totalorder %s37, %s38
      %p49 = scmp.eq.s32.totalorder %s29, 0
      %p50 = por %p48, %p49
      %p51 = scmp.ne.s32.totalorder %s37, %s38
      %p52 = scmp.eq.s32.totalorder %s30, 1
      %p53 = por %p51, %p52
      %p55 = scmp.ne.s32.totalorder %s38, %s54
      %p56 = scmp.eq.s32.totalorder %s30, 0
      %p57 = por %p55, %p56
      %s58 = ssub.s32 %s24, %s31
      %p59 = scmp.eq.s32.totalorder %s58, 0
      %s61 = sadd.s32 %s60, 1
      %s62 = scalar_select %p59, %s60, %s61
      %p65 = pneg %p59
      %p66 = scmp.eq.s32.totalorder %s24, 1
      %p67 = por %p65, %p66
      %p68 = scmp.ne.s32.totalorder %s60, %s63
      %p69 = scmp.eq.s32.totalorder %s24, 0
      %p70 = por %p68, %p69
      %p71 = scmp.ne.s32.totalorder %s60, %s63
      %p72 = scmp.eq.s32.totalorder %s29, 1
      %p73 = por %p71, %p72
      %p74 = scmp.ne.s32.totalorder %s63, %s64
      %p75 = scmp.eq.s32.totalorder %s29, 0
      %p76 = por %p74, %p75
      %p77 = scmp.ne.s32.totalorder %s63, %s64
      %p78 = scmp.eq.s32.totalorder %s30, 1
      %p79 = por %p77, %p78
      %p81 = scmp.ne.s32.totalorder %s64, %s80
      %p82 = scmp.eq.s32.totalorder %s30, 0
      %p83 = por %p81, %p82
      %s84 = ssub.s32 %s24, %s31
      %p85 = scmp.eq.s32.totalorder %s84, 0
      %s87 = sadd.s32 %s86, 1
      %s88 = scalar_select %p85, %s86, %s87
      %p91 = pneg %p85
      %p92 = scmp.eq.s32.totalorder %s24, 1
      %p93 = por %p91, %p92
      %p94 = scmp.ne.s32.totalorder %s86, %s89
      %p95 = scmp.eq.s32.totalorder %s24, 0
      %p96 = por %p94, %p95
      %p97 = scmp.ne.s32.totalorder %s86, %s89
      %p98 = scmp.eq.s32.totalorder %s29, 1
      %p99 = por %p97, %p98
      %p100 = scmp.ne.s32.totalorder %s89, %s90
      %p101 = scmp.eq.s32.totalorder %s29, 0
      %p102 = por %p100, %p101
      %p103 = scmp.ne.s32.totalorder %s89, %s90
      %p104 = scmp.eq.s32.totalorder %s30, 1
      %p105 = por %p103, %p104
      %p107 = scmp.ne.s32.totalorder %s90, %s106
      %p108 = scmp.eq.s32.totalorder %s30, 0
      %p109 = por %p107, %p108
      %s110 = ssub.s32 %s24, %s31
      %p111 = scmp.eq.s32.totalorder %s110, 0
      %s113 = sadd.s32 %s112, 1
      %s114 = scalar_select %p111, %s112, %s113
      %p117 = pneg %p111
      %p118 = scmp.eq.s32.totalorder %s24, 1
      %p119 = por %p117, %p118
      %p120 = scmp.ne.s32.totalorder %s112, %s115
      %p121 = scmp.eq.s32.totalorder %s24, 0
      %p122 = por %p120, %p121
      %p123 = scmp.ne.s32.totalorder %s112, %s115
      %p124 = scmp.eq.s32.totalorder %s29, 1
      %p125 = por %p123, %p124
      %p126 = scmp.ne.s32.totalorder %s115, %s116
      %p127 = scmp.eq.s32.totalorder %s29, 0
      %p128 = por %p126, %p127
      %p129 = scmp.ne.s32.totalorder %s115, %s116
      %p130 = scmp.eq.s32.totalorder %s30, 1
      %p131 = por %p129, %p130
      %p133 = scmp.ne.s32.totalorder %s116, %s132
      %p134 = scmp.eq.s32.totalorder %s30, 0
      %p135 = por %p133, %p134
      %s137 = sadd.s32 %s136, 1
      %p140 = scmp.eq.s32.totalorder %s24, 1
      %p141 = scmp.ne.s32.totalorder %s136, %s138
      %p142 = scmp.eq.s32.totalorder %s24, 0
      %p143 = por %p141, %p142
      %p144 = scmp.ne.s32.totalorder %s136, %s138
      %p145 = scmp.eq.s32.totalorder %s29, 1
      %p146 = por %p144, %p145
      %p147 = scmp.ne.s32.totalorder %s138, %s139
      %p148 = scmp.eq.s32.totalorder %s29, 0
      %p149 = por %p147, %p148
      %p150 = scmp.ne.s32.totalorder %s138, %s139
      %p151 = scmp.eq.s32.totalorder %s30, 1
      %p152 = por %p150, %p151
      %p154 = scmp.ne.s32.totalorder %s139, %s153
      %p155 = scmp.eq.s32.totalorder %s30, 0
      %p156 = por %p154, %p155
      %s158 = sadd.s32 %s157, 1
      %p161 = scmp.eq.s32.totalorder %s24, 1
      %p162 = scmp.ne.s32.totalorder %s157, %s159
      %p163 = scmp.eq.s32.totalorder %s24, 0
      %p164 = por %p162, %p163
      %p165 = scmp.ne.s32.totalorder %s157, %s159
      %p166 = scmp.eq.s32.totalorder %s29, 1
      %p167 = por %p165, %p166
      %p168 = scmp.ne.s32.totalorder %s159, %s160
      %p169 = scmp.eq.s32.totalorder %s29, 0
      %p170 = por %p168, %p169
      %p171 = scmp.ne.s32.totalorder %s159, %s160
      %p172 = scmp.eq.s32.totalorder %s30, 1
      %p173 = por %p171, %p172
      %p175 = scmp.ne.s32.totalorder %s160, %s174
      %p176 = scmp.eq.s32.totalorder %s30, 0
      %p177 = por %p175, %p176
      %s178 = ssub.s32 %s24, %s31
      %p179 = scmp.eq.s32.totalorder %s178, 0
      %s181 = sadd.s32 %s180, 1
      %s182 = scalar_select %p179, %s180, %s181
      %p185 = pneg %p179
      %p186 = scmp.eq.s32.totalorder %s24, 1
      %p187 = por %p185, %p186
      %p188 = scmp.ne.s32.totalorder %s180, %s183
      %p189 = scmp.eq.s32.totalorder %s24, 0
      %p190 = por %p188, %p189
      %p191 = scmp.ne.s32.totalorder %s180, %s183
      %p192 = scmp.eq.s32.totalorder %s29, 1
      %p193 = por %p191, %p192
      %p194 = scmp.ne.s32.totalorder %s183, %s184
      %p195 = scmp.eq.s32.totalorder %s29, 0
      %p196 = por %p194, %p195
      %p197 = scmp.ne.s32.totalorder %s183, %s184
      %p198 = scmp.eq.s32.totalorder %s30, 1
      %p199 = por %p197, %p198
      %p201 = scmp.ne.s32.totalorder %s184, %s200
      %p202 = scmp.eq.s32.totalorder %s30, 0
      %p203 = por %p201, %p202
      %p204 = scmp.le.s32.totalorder 1, %s24
      %p205 = scmp.lt.s32.totalorder %s24, 3
      %p206 = pnand %p204, %p205
      %p207 = pneg %p206
      // Predicated region
      $region9: #{tpu_custom_call.1} parent=5 // pred_check
        _
      $region10: #{tpu_custom_call.1} parent=5 // pred_check_branch
        %209 = sbr.rel (%p206) target = $region12
      $region11: #{tpu_custom_call.1} parent=5 // pred_region
        %s210 = ssub.s32 %s24, 1
        // Predicated region
        $region13: #{tpu_custom_call.1} parent=11 // pred_check
          %p211 = pneg %p149
        $region14: #{tpu_custom_call.1} parent=11 // pred_check_branch
          %213 = sbr.rel (%p211) target = $region16
        $region15: #{tpu_custom_call.1} parent=11 // pred_region
          %215 = vsyncadd [#allocation9], 0
          %s216 = sshll.u32 %s4, 4
          %s217 = int_to_ptr.hbm [resolvable:$true] %s216
          %s218 = sshll.u32 [#allocation10], 4
          %s219 = int_to_ptr.vmem [resolvable:$true] %s218
          %224 = dma.hbm_to_vmem [thread:$0]  %s217, 2048, %s219, [#allocation9], 128, 128, 8
        $region16: #{tpu_custom_call.1} parent=11 // pred_fallthru
          _
        // Predicated region
        $region17: #{tpu_custom_call.1} parent=11 // pred_check
          %p225 = pneg %p170
        $region18: #{tpu_custom_call.1} parent=11 // pred_check_branch
          %227 = sbr.rel (%p225) target = $region20
        $region19: #{tpu_custom_call.1} parent=11 // pred_region
          _
        $region20: #{tpu_custom_call.1} parent=11 // pred_fallthru
          _
      $region12: #{tpu_custom_call.1} parent=5 // pred_fallthru
        _
      %p228 = scmp.lt.s32.totalorder %s24, 2
      // Predicated region
      $region21: #{tpu_custom_call.1} parent=5 // pred_check
        %p229 = pneg %p228
      $region22: #{tpu_custom_call.1} parent=5 // pred_check_branch
        %231 = sbr.rel (%p229) target = $region24
      $region23: #{tpu_custom_call.1} parent=5 // pred_region
        // Predicated region
        $region25: #{tpu_custom_call.1} parent=23 // pred_check
          %p232 = pneg %p44
        $region26: #{tpu_custom_call.1} parent=23 // pred_check_branch
          %234 = sbr.rel (%p232) target = $region28
        $region27: #{tpu_custom_call.1} parent=23 // pred_region
          %s235 = sand.u32 %s34, 1
          %s236 = scalar_lea.sflag [#allocation3], %s235
          %s237 = sand.u32 %s34, 1
          %s238 = smul.addr %s237, 8
          %s239 = scalar_lea.vmem [#allocation2], %s238
          %241 = vsyncadd %s236, 0
          %s242 = smul.addr %s24, 8
          %s243 = scalar_lea.hbm %s0, %s242
          %s245 = sshll.u32 %s243, 4
          %s246 = int_to_ptr.hbm [resolvable:$true] %s245
          %s247 = sshll.u32 %s239, 4
          %s248 = int_to_ptr.vmem [resolvable:$true] %s247
          %250 = dma.hbm_to_vmem [thread:$0]  %s246, 128, %s248, %s236
        $region28: #{tpu_custom_call.1} parent=23 // pred_fallthru
          _
        // Predicated region
        $region29: #{tpu_custom_call.1} parent=23 // pred_check
          %p251 = pneg %p70
        $region30: #{tpu_custom_call.1} parent=23 // pred_check_branch
          %253 = sbr.rel (%p251) target = $region32
        $region31: #{tpu_custom_call.1} parent=23 // pred_region
          %s254 = sand.u32 %s24, 1
          %s255 = scalar_lea.sflag [#allocation6], %s254
          %s256 = sand.u32 %s60, 1
          %s257 = smul.addr %s256, 8
          %s258 = scalar_lea.vmem [#allocation5], %s257
          %260 = vsyncadd %s255, 0
          %s261 = smul.addr %s24, 8
          %s262 = scalar_lea.hbm %s1, %s261
          %s264 = sshll.u32 %s262, 4
          %s265 = int_to_ptr.hbm [resolvable:$true] %s264
          %s266 = sshll.u32 %s258, 4
          %s267 = int_to_ptr.vmem [resolvable:$true] %s266
          %269 = dma.hbm_to_vmem [thread:$0]  %s265, 128, %s267, %s255
        $region32: #{tpu_custom_call.1} parent=23 // pred_fallthru
          _
        // Predicated region
        $region33: #{tpu_custom_call.1} parent=23 // pred_check
          %p270 = pneg %p96
        $region34: #{tpu_custom_call.1} parent=23 // pred_check_branch
          %272 = sbr.rel (%p270) target = $region36
        $region35: #{tpu_custom_call.1} parent=23 // pred_region
          %s273 = sand.u32 %s24, 1
          %s274 = scalar_lea.sflag [#allocation6], %s273
          %s275 = sand.u32 %s86, 1
          %s276 = smul.addr %s275, 8
          %s277 = scalar_lea.vmem [#allocation7], %s276
          %279 = vsyncadd %s274, 0
          %s280 = smul.addr %s24, 8
          %s281 = scalar_lea.hbm %s2, %s280
          %s283 = sshll.u32 %s281, 4
          %s284 = int_to_ptr.hbm [resolvable:$true] %s283
          %s285 = sshll.u32 %s277, 4
          %s286 = int_to_ptr.vmem [resolvable:$true] %s285
          %288 = dma.hbm_to_vmem [thread:$0]  %s284, 128, %s286, %s274
        $region36: #{tpu_custom_call.1} parent=23 // pred_fallthru
          _
        // Predicated region
        $region37: #{tpu_custom_call.1} parent=23 // pred_check
          %p289 = pneg %p122
        $region38: #{tpu_custom_call.1} parent=23 // pred_check_branch
          %291 = sbr.rel (%p289) target = $region40
        $region39: #{tpu_custom_call.1} parent=23 // pred_region
          %s292 = sand.u32 %s24, 1
          %s293 = scalar_lea.sflag [#allocation9], %s292
          %s294 = sand.u32 %s112, 1
          %s295 = scalar_lea.vmem [#allocation8], %s294
          %297 = vsyncadd %s293, 0
          %s298 = scalar_lea.hbm %s3, %s24
          %s300 = sshll.u32 %s298, 4
          %s301 = int_to_ptr.hbm [resolvable:$true] %s300
          %s302 = sshll.u32 %s295, 4
          %s303 = int_to_ptr.vmem [resolvable:$true] %s302
          %305 = dma.hbm_to_vmem [thread:$0]  %s301, 16, %s303, %s293
        $region40: #{tpu_custom_call.1} parent=23 // pred_fallthru
          _
      $region24: #{tpu_custom_call.1} parent=5 // pred_fallthru
        _
      %p306 = scmp.le.s32.totalorder 1, %s24
      %p307 = scmp.lt.s32.totalorder %s24, 3
      %p308 = pnand %p306, %p307
      %p309 = pneg %p308
      // Predicated region
      $region41: #{tpu_custom_call.1} parent=5 // pred_check
        _
      $region42: #{tpu_custom_call.1} parent=5 // pred_check_branch
        %311 = sbr.rel (%p308) target = $region44
      $region43: #{tpu_custom_call.1} parent=5 // pred_region
        %s312 = ssub.s32 %s24, 1
        %s313 = sand.u32 %s37, 1
        %s314 = scalar_lea.sflag [#allocation3], %s313
        %s315 = sand.u32 %s37, 1
        %s316 = smul.addr %s315, 8
        %s317 = scalar_lea.vmem [#allocation2], %s316
        // Predicated region
        $region45: #{tpu_custom_call.1} parent=43 // pred_check
          %p318 = pneg %p50
        $region46: #{tpu_custom_call.1} parent=43 // pred_check_branch
          %320 = sbr.rel (%p318) target = $region48
        $region47: #{tpu_custom_call.1} parent=43 // pred_region
          %322 = dma.done %s314, 128
        $region48: #{tpu_custom_call.1} parent=43 // pred_fallthru
          _
        %s323 = sand.u32 %s29, 1
        %s324 = scalar_lea.sflag [#allocation6], %s323
        %s325 = sand.u32 %s63, 1
        %s326 = smul.addr %s325, 8
        %s327 = scalar_lea.vmem [#allocation5], %s326
        // Predicated region
        $region49: #{tpu_custom_call.1} parent=43 // pred_check
          %p328 = pneg %p76
        $region50: #{tpu_custom_call.1} parent=43 // pred_check_branch
          %330 = sbr.rel (%p328) target = $region52
        $region51: #{tpu_custom_call.1} parent=43 // pred_region
          %332 = dma.done %s324, 128
        $region52: #{tpu_custom_call.1} parent=43 // pred_fallthru
          _
        %s333 = sand.u32 %s29, 1
        %s334 = scalar_lea.sflag [#allocation6], %s333
        %s335 = sand.u32 %s89, 1
        %s336 = smul.addr %s335, 8
        %s337 = scalar_lea.vmem [#allocation7], %s336
        // Predicated region
        $region53: #{tpu_custom_call.1} parent=43 // pred_check
          %p338 = pneg %p102
        $region54: #{tpu_custom_call.1} parent=43 // pred_check_branch
          %340 = sbr.rel (%p338) target = $region56
        $region55: #{tpu_custom_call.1} parent=43 // pred_region
          %342 = dma.done %s334, 128
        $region56: #{tpu_custom_call.1} parent=43 // pred_fallthru
          _
        %s343 = sand.u32 %s29, 1
        %s344 = scalar_lea.sflag [#allocation9], %s343
        %s345 = sand.u32 %s115, 1
        %s346 = scalar_lea.vmem [#allocation8], %s345
        // Predicated region
        $region57: #{tpu_custom_call.1} parent=43 // pred_check
          %p347 = pneg %p128
        $region58: #{tpu_custom_call.1} parent=43 // pred_check_branch
          %349 = sbr.rel (%p347) target = $region60
        $region59: #{tpu_custom_call.1} parent=43 // pred_region
          %351 = dma.done %s344, 16
        $region60: #{tpu_custom_call.1} parent=43 // pred_fallthru
          _
        // Predicated region
        $region61: #{tpu_custom_call.1} parent=43 // pred_check
          %p352 = pneg %p149
        $region62: #{tpu_custom_call.1} parent=43 // pred_check_branch
          %354 = sbr.rel (%p352) target = $region64
        $region63: #{tpu_custom_call.1} parent=43 // pred_region
          %356 = dma.done [#allocation9], 2048
        $region64: #{tpu_custom_call.1} parent=43 // pred_fallthru
          _
        %s357 = sand.u32 %s37, 1
        %s358 = scalar_lea.sflag [#allocation3], %s357
        %s359 = sand.u32 %s37, 1
        %s360 = smul.addr %s359, 8
        %s361 = scalar_lea.vmem [#allocation2], %s360
        %p362 = pneg %p50
        %p363 = pneg %p47
        %s364 = sand.u32 %s29, 1
        %s365 = scalar_lea.sflag [#allocation6], %s364
        %s366 = sand.u32 %s63, 1
        %s367 = smul.addr %s366, 8
        %s368 = scalar_lea.vmem [#allocation5], %s367
        %p369 = pneg %p76
        %p370 = pneg %p73
        %s371 = sand.u32 %s29, 1
        %s372 = scalar_lea.sflag [#allocation6], %s371
        %s373 = sand.u32 %s89, 1
        %s374 = smul.addr %s373, 8
        %s375 = scalar_lea.vmem [#allocation7], %s374
        %p376 = pneg %p102
        %p377 = pneg %p99
        %s378 = sand.u32 %s29, 1
        %s379 = scalar_lea.sflag [#allocation9], %s378
        %s380 = sand.u32 %s115, 1
        %s381 = scalar_lea.vmem [#allocation8], %s380
        %p382 = pneg %p128
        %p383 = pneg %p125
        %p384 = pneg %p149
        %p385 = pneg %p146
        %p386 = pneg %p170
        %p387 = pneg %p167
        %p388 = pneg %p196
        %p389 = pneg %p193
        %s390 = sand.u32 %s183, 1
        %s391 = scalar_lea.sflag [#allocation4], %s390
        %s392 = sand.u32 %s183, 1
        %s393 = smul.addr %s392, 8
        %s394 = scalar_lea.vmem [#allocation11], %s393
        %v396 = vld [vmem:[%s317] sm:$0xff]
        %v397 = vld [vmem:[%s327] sm:$0xff]
        %v398 = vld [vmem:[%s337] sm:$0xff]
        %v399 = vld [vmem:[#allocation10] sm:$0xff]
        %v400 = vld [vmem:[#allocation10 + $0x8] sm:$0xff]
        %v401 = vld [vmem:[#allocation10 + $0x10] sm:$0xff]
        %v402 = vld [vmem:[#allocation10 + $0x18] sm:$0xff]
        %v403 = vld [vmem:[#allocation10 + $0x20] sm:$0xff]
        %v404 = vld [vmem:[#allocation10 + $0x28] sm:$0xff]
        %v405 = vld [vmem:[#allocation10 + $0x30] sm:$0xff]
        %v406 = vld [vmem:[#allocation10 + $0x38] sm:$0xff]
        %v407 = vld [vmem:[#allocation10 + $0x40] sm:$0xff]
        %v408 = vld [vmem:[#allocation10 + $0x48] sm:$0xff]
        %v409 = vld [vmem:[#allocation10 + $0x50] sm:$0xff]
        %v410 = vld [vmem:[#allocation10 + $0x58] sm:$0xff]
        %v411 = vld [vmem:[#allocation10 + $0x60] sm:$0xff]
        %v412 = vld [vmem:[#allocation10 + $0x68] sm:$0xff]
        %v413 = vld [vmem:[#allocation10 + $0x70] sm:$0xff]
        %v414 = vld [vmem:[#allocation10 + $0x78] sm:$0xff]
        %v415 = vld [vmem:[%s5] sm:$0xf]
        %v416 = vpack.c.bf16 %v396, %v396
        %v417 = vpack.c.bf16 %v400, %v399
        %v418 = vpack.c.bf16 %v402, %v401
        %v419 = vperm.slane %v415, 0
        %vm420 = vcmask 261120
        %v422 = vsel %vm420, %v416, 0
        %424 = vmatpush.bf16.msra.mxu0 0
        %425 = vmatpush.bf16.msra.mxu0 0
        %426 = vmatpush.bf16.msra.mxu0 0
        %427 = vmatpush.bf16.msra.mxu0 0
        %428 = vmatpush.bf16.msra.mxu0 0
        %429 = vmatpush.bf16.msra.mxu0 0
        %430 = vmatpush.bf16.msra.mxu0 %v418
        %431 = vmatpush.bf16.msra.mxu0 %v417
        %432 = vmatmul.bf16.gmra.mxu0 %v422
        %v433 = vpop.f32.mrf.mxu0
        %v434 = vadd.f32 %v419, %v433
        %v435 = vpop.f32.mrf.mxu0
        %436 = vdwg.mxu0
        %v437 = vmul.f32 %v434, 0.35355338
        %v438 = vpack.c.bf16 %v397, %v397
        %v439 = vpack.c.bf16 %v404, %v403
        %v440 = vpack.c.bf16 %v406, %v405
        %v441 = vperm.slane %v415, 1
        %v443 = vsel %vm420, %v438, 0
        %445 = vmatpush.bf16.msra.mxu0 0
        %446 = vmatpush.bf16.msra.mxu0 0
        %447 = vmatpush.bf16.msra.mxu0 0
        %448 = vmatpush.bf16.msra.mxu0 0
        %449 = vmatpush.bf16.msra.mxu0 0
        %450 = vmatpush.bf16.msra.mxu0 0
        %451 = vmatpush.bf16.msra.mxu0 %v440
        %452 = vmatpush.bf16.msra.mxu0 %v439
        %453 = vmatmul.bf16.gmra.mxu0 %v443
        %v454 = vpop.f32.mrf.mxu0
        %v455 = vadd.f32 %v441, %v454
        %v456 = vpop.f32.mrf.mxu0
        %457 = vdwg.mxu0
        %v458 = vpack.c.bf16 %v398, %v398
        %v459 = vpack.c.bf16 %v408, %v407
        %v460 = vpack.c.bf16 %v410, %v409
        %v461 = vperm.slane %v415, 2
        %v463 = vsel %vm420, %v458, 0
        %465 = vmatpush.bf16.msra.mxu0 0
        %466 = vmatpush.bf16.msra.mxu0 0
        %467 = vmatpush.bf16.msra.mxu0 0
        %468 = vmatpush.bf16.msra.mxu0 0
        %469 = vmatpush.bf16.msra.mxu0 0
        %470 = vmatpush.bf16.msra.mxu0 0
        %471 = vmatpush.bf16.msra.mxu0 %v460
        %472 = vmatpush.bf16.msra.mxu0 %v459
        %473 = vmatmul.bf16.gmra.mxu0 %v463
        %v474 = vpop.f32.mrf.mxu0
        %v475 = vadd.f32 %v461, %v474
        %v476 = vpop.f32.mrf.mxu0
        %477 = vdwg.mxu0
        %v478 = vld [vmem:[%s346] sm:$0x1]
        %v480 = vperm.slane %v478, 0
        %v482 = vpack.c.bf16 %v437, %v437
        %v483 = vpack.c.bf16 %v455, %v455
        %vm484 = vcmask 64512
        %v486 = vsel %vm484, %v482, 0
        %v489 = vsel %vm484, %v483, 0
        %491 = vmatpush.bf16.xpose.msra.mxu0 0
        %492 = vmatpush.bf16.xpose.msra.mxu0 0
        %493 = vmatpush.bf16.xpose.msra.mxu0 0
        %494 = vmatpush.bf16.xpose.msra.mxu0 0
        %495 = vmatpush.bf16.xpose.msra.mxu0 0
        %496 = vmatpush.bf16.xpose.msra.mxu0 0
        %497 = vmatpush.bf16.xpose.msra.mxu0 0
        %498 = vmatpush.bf16.xpose.msra.mxu0 %v489
        %499 = vmatmul.bf16.gmra.mxu0 %v486
        %v500 = vpop.f32.mrf.mxu0
        %v501 = vadd.f32 %v480, %v500
        %v502 = vpop.f32.mrf.mxu0
        %503 = vdwg.mxu0
        %v504 = vsel %vm484, %v501, -inf
        %505 = vmax.xlane.f32.xlu0 %v504
        %v506 = vpop.xlane.xlu0 %505
        %v507 = vsub.f32 %v501, %v506
        %v508 = vmul.f32 %v507, 1.442695
        %v509 = vpow.pop %v508
        %v510 = vsel %vm484, %v509, 0.0
        %511 = vadd.xlane.f32.xlu0 %v510
        %v512 = vpop.xlane.xlu0 %511
        %v513 = vrcp.pop %v512
        %v514 = vmul.f32 %v509, %v513
        %v515 = vpack.c.bf16 %v514, %v514
        %v516 = vpack.c.bf16 %v475, %v475
        %v518 = vsel %vm484, %v515, 0
        %vm520 = vcmask 1043456
        %v522 = vsel %vm520, %v516, 0
        %524 = vmatpush.bf16.msra.mxu0 0
        %525 = vmatpush.bf16.msra.mxu0 0
        %526 = vmatpush.bf16.msra.mxu0 0
        %527 = vmatpush.bf16.msra.mxu0 0
        %528 = vmatpush.bf16.msra.mxu0 0
        %529 = vmatpush.bf16.msra.mxu0 0
        %530 = vmatpush.bf16.msra.mxu0 0
        %531 = vmatpush.bf16.msra.mxu0 %v522
        %532 = vmatmul.bf16.gmra.mxu0 %v518
        %v533 = vpop.f32.mrf.mxu0
        %v534 = vadd.f32 0.0, %v533
        %v535 = vpop.f32.mrf.mxu0
        %536 = vdwg.mxu0
        %v538 = vunpack.c.l.b16 %v482
        %v539 = vpack.c.b16 %v538, %v538
        %540 = vrot.lane.b32.xlu0 %v539, 120
        %v541 = vpop.permute.xlu0 %540
        %v543 = vunpack.c.l.b16 %v483
        %v544 = vpack.c.b16 %v543, %v543
        %545 = vrot.lane.b32.xlu0 %v544, 120
        %v546 = vpop.permute.xlu0 %545
        %v548 = vsel %vm484, %v541, 0
        %v551 = vsel %vm484, %v546, 0
        %553 = vmatpush.bf16.xpose.msra.mxu0 0
        %554 = vmatpush.bf16.xpose.msra.mxu0 0
        %555 = vmatpush.bf16.xpose.msra.mxu0 0
        %556 = vmatpush.bf16.xpose.msra.mxu0 0
        %557 = vmatpush.bf16.xpose.msra.mxu0 0
        %558 = vmatpush.bf16.xpose.msra.mxu0 0
        %559 = vmatpush.bf16.xpose.msra.mxu0 0
        %560 = vmatpush.bf16.xpose.msra.mxu0 %v551
        %561 = vmatmul.bf16.gmra.mxu0 %v548
        %v562 = vpop.f32.mrf.mxu0
        %v563 = vadd.f32 %v480, %v562
        %v564 = vpop.f32.mrf.mxu0
        %565 = vdwg.mxu0
        %v566 = vsel %vm484, %v563, -inf
        %567 = vmax.xlane.f32.xlu0 %v566
        %v568 = vpop.xlane.xlu0 %567
        %v569 = vsub.f32 %v563, %v568
        %v570 = vmul.f32 %v569, 1.442695
        %v571 = vpow.pop %v570
        %v572 = vsel %vm484, %v571, 0.0
        %573 = vadd.xlane.f32.xlu0 %v572
        %v574 = vpop.xlane.xlu0 %573
        %v575 = vrcp.pop %v574
        %v576 = vmul.f32 %v571, %v575
        %v577 = vpack.c.bf16 %v576, %v576
        %v579 = vunpack.c.l.b16 %v516
        %v580 = vpack.c.b16 %v579, %v579
        %581 = vrot.lane.b32.xlu0 %v580, 120
        %v582 = vpop.permute.xlu0 %581
        %v584 = vsel %vm484, %v577, 0
        %v587 = vsel %vm520, %v582, 0
        %589 = vmatpush.bf16.msra.mxu0 0
        %590 = vmatpush.bf16.msra.mxu0 0
        %591 = vmatpush.bf16.msra.mxu0 0
        %592 = vmatpush.bf16.msra.mxu0 0
        %593 = vmatpush.bf16.msra.mxu0 0
        %594 = vmatpush.bf16.msra.mxu0 0
        %595 = vmatpush.bf16.msra.mxu0 0
        %596 = vmatpush.bf16.msra.mxu0 %v587
        %597 = vmatmul.bf16.gmra.mxu0 %v584
        %v598 = vpop.f32.mrf.mxu0
        %v599 = vadd.f32 0.0, %v598
        %v600 = vpop.f32.mrf.mxu0
        %601 = vdwg.mxu0
        %602 = vrot.lane.b32.xlu0 %v539, 112
        %v603 = vpop.permute.xlu0 %602
        %604 = vrot.lane.b32.xlu0 %v544, 112
        %v605 = vpop.permute.xlu0 %604
        %v607 = vsel %vm484, %v603, 0
        %v610 = vsel %vm484, %v605, 0
        %612 = vmatpush.bf16.xpose.msra.mxu0 0
        %613 = vmatpush.bf16.xpose.msra.mxu0 0
        %614 = vmatpush.bf16.xpose.msra.mxu0 0
        %615 = vmatpush.bf16.xpose.msra.mxu0 0
        %616 = vmatpush.bf16.xpose.msra.mxu0 0
        %617 = vmatpush.bf16.xpose.msra.mxu0 0
        %618 = vmatpush.bf16.xpose.msra.mxu0 0
        %619 = vmatpush.bf16.xpose.msra.mxu0 %v610
        %620 = vmatmul.bf16.gmra.mxu0 %v607
        %v621 = vpop.f32.mrf.mxu0
        %v622 = vadd.f32 %v480, %v621
        %v623 = vpop.f32.mrf.mxu0
        %624 = vdwg.mxu0
        %v625 = vsel %vm484, %v622, -inf
        %626 = vmax.xlane.f32.xlu0 %v625
        %v627 = vpop.xlane.xlu0 %626
        %v628 = vsub.f32 %v622, %v627
        %v629 = vmul.f32 %v628, 1.442695
        %v630 = vpow.pop %v629
        %v631 = vsel %vm484, %v630, 0.0
        %632 = vadd.xlane.f32.xlu0 %v631
        %v633 = vpop.xlane.xlu0 %632
        %v634 = vrcp.pop %v633
        %v635 = vmul.f32 %v630, %v634
        %v636 = vpack.c.bf16 %v635, %v635
        %637 = vrot.lane.b32.xlu0 %v580, 112
        %v638 = vpop.permute.xlu0 %637
        %v640 = vsel %vm484, %v636, 0
        %v643 = vsel %vm520, %v638, 0
        %645 = vmatpush.bf16.msra.mxu0 0
        %646 = vmatpush.bf16.msra.mxu0 0
        %647 = vmatpush.bf16.msra.mxu0 0
        %648 = vmatpush.bf16.msra.mxu0 0
        %649 = vmatpush.bf16.msra.mxu0 0
        %650 = vmatpush.bf16.msra.mxu0 0
        %651 = vmatpush.bf16.msra.mxu0 0
        %652 = vmatpush.bf16.msra.mxu0 %v643
        %653 = vmatmul.bf16.gmra.mxu0 %v640
        %v654 = vpop.f32.mrf.mxu0
        %v655 = vadd.f32 0.0, %v654
        %v656 = vpop.f32.mrf.mxu0
        %657 = vdwg.mxu0
        %658 = vrot.lane.b32.xlu0 %v539, 104
        %v659 = vpop.permute.xlu0 %658
        %660 = vrot.lane.b32.xlu0 %v544, 104
        %v661 = vpop.permute.xlu0 %660
        %v663 = vsel %vm484, %v659, 0
        %v666 = vsel %vm484, %v661, 0
        %668 = vmatpush.bf16.xpose.msra.mxu0 0
        %669 = vmatpush.bf16.xpose.msra.mxu0 0
        %670 = vmatpush.bf16.xpose.msra.mxu0 0
        %671 = vmatpush.bf16.xpose.msra.mxu0 0
        %672 = vmatpush.bf16.xpose.msra.mxu0 0
        %673 = vmatpush.bf16.xpose.msra.mxu0 0
        %674 = vmatpush.bf16.xpose.msra.mxu0 0
        %675 = vmatpush.bf16.xpose.msra.mxu0 %v666
        %676 = vmatmul.bf16.gmra.mxu0 %v663
        %v677 = vpop.f32.mrf.mxu0
        %v678 = vadd.f32 %v480, %v677
        %v679 = vpop.f32.mrf.mxu0
        %680 = vdwg.mxu0
        %v681 = vsel %vm484, %v678, -inf
        %682 = vmax.xlane.f32.xlu0 %v681
        %v683 = vpop.xlane.xlu0 %682
        %v684 = vsub.f32 %v678, %v683
        %v685 = vmul.f32 %v684, 1.442695
        %v686 = vpow.pop %v685
        %v687 = vsel %vm484, %v686, 0.0
        %688 = vadd.xlane.f32.xlu0 %v687
        %v689 = vpop.xlane.xlu0 %688
        %v690 = vrcp.pop %v689
        %v691 = vmul.f32 %v686, %v690
        %v692 = vpack.c.bf16 %v691, %v691
        %693 = vrot.lane.b32.xlu0 %v580, 104
        %v694 = vpop.permute.xlu0 %693
        %v696 = vsel %vm484, %v692, 0
        %v699 = vsel %vm520, %v694, 0
        %701 = vmatpush.bf16.msra.mxu0 0
        %702 = vmatpush.bf16.msra.mxu0 0
        %703 = vmatpush.bf16.msra.mxu0 0
        %704 = vmatpush.bf16.msra.mxu0 0
        %705 = vmatpush.bf16.msra.mxu0 0
        %706 = vmatpush.bf16.msra.mxu0 0
        %707 = vmatpush.bf16.msra.mxu0 0
        %708 = vmatpush.bf16.msra.mxu0 %v699
        %709 = vmatmul.bf16.gmra.mxu0 %v696
        %v710 = vpop.f32.mrf.mxu0
        %v711 = vadd.f32 0.0, %v710
        %v712 = vpop.f32.mrf.mxu0
        %713 = vdwg.mxu0
        %715 = vrot.lane.b32.xlu0 %v599, 8
        %v716 = vpop.permute.xlu0 %715
        %719 = vrot.lane.b32.xlu0 %v655, 16
        %v720 = vpop.permute.xlu0 %719
        %723 = vrot.lane.b32.xlu0 %v711, 24
        %v724 = vpop.permute.xlu0 %723
        %v726 = vsel %vm484, %v534, %v716
        %vm727 = vcmask 130048
        %v728 = vsel %vm727, %v726, %v720
        %vm729 = vcmask 195584
        %v730 = vsel %vm729, %v728, %v724
        %v731 = vpack.c.bf16 %v730, %v730
        %v732 = vpack.c.bf16 %v412, %v411
        %v733 = vpack.c.bf16 %v414, %v413
        %v734 = vperm.slane %v415, 3
        %v736 = vsel %vm420, %v731, 0
        %738 = vmatpush.bf16.msra.mxu0 0
        %739 = vmatpush.bf16.msra.mxu0 0
        %740 = vmatpush.bf16.msra.mxu0 0
        %741 = vmatpush.bf16.msra.mxu0 0
        %742 = vmatpush.bf16.msra.mxu0 0
        %743 = vmatpush.bf16.msra.mxu0 0
        %744 = vmatpush.bf16.msra.mxu0 %v733
        %745 = vmatpush.bf16.msra.mxu0 %v732
        %746 = vmatmul.bf16.gmra.mxu0 %v736
        %v747 = vpop.f32.mrf.mxu0
        %v748 = vadd.f32 %v734, %v747
        %v749 = vpop.f32.mrf.mxu0
        %750 = vdwg.mxu0
        %751 = vst.msk [vmem:[%s394] sm:$0xff] %vm420, %v748
        %s752 = sand.u32 %s183, 1
        %s753 = scalar_lea.sflag [#allocation4], %s752
        %s754 = sand.u32 %s183, 1
        %s755 = smul.addr %s754, 8
        %s756 = scalar_lea.vmem [#allocation11], %s755
        // Predicated region
        $region65: #{tpu_custom_call.1} parent=43 // pred_check
          %p757 = pneg %p193
        $region66: #{tpu_custom_call.1} parent=43 // pred_check_branch
          %759 = sbr.rel (%p757) target = $region68
        $region67: #{tpu_custom_call.1} parent=43 // pred_region
          %761 = vsyncadd %s753, 0
          %s762 = smul.addr %s29, 8
          %s763 = scalar_lea.hbm %s6, %s762
          %s765 = sshll.u32 %s756, 4
          %s766 = int_to_ptr.vmem [resolvable:$true] %s765
          %s767 = sshll.u32 %s763, 4
          %s768 = int_to_ptr.hbm [resolvable:$true] %s767
          %770 = dma.vmem_to_hbm [thread:$0]  %s766, 128, %s768, %s753
        $region68: #{tpu_custom_call.1} parent=43 // pred_fallthru
          _
      $region44: #{tpu_custom_call.1} parent=5 // pred_fallthru
        _
      %p771 = scmp.le.s32.totalorder 2, %s24
      // Predicated region
      $region69: #{tpu_custom_call.1} parent=5 // pred_check
        %p772 = pneg %p771
      $region70: #{tpu_custom_call.1} parent=5 // pred_check_branch
        %774 = sbr.rel (%p772) target = $region72
      $region71: #{tpu_custom_call.1} parent=5 // pred_region
        %s775 = ssub.s32 %s24, 2
        // Predicated region
        $region73: #{tpu_custom_call.1} parent=71 // pred_check
          %p776 = pneg %p199
        $region74: #{tpu_custom_call.1} parent=71 // pred_check_branch
          %778 = sbr.rel (%p776) target = $region76
        $region75: #{tpu_custom_call.1} parent=71 // pred_region
          %s779 = sand.u32 %s184, 1
          %s780 = scalar_lea.sflag [#allocation4], %s779
          %s781 = sand.u32 %s184, 1
          %s782 = smul.addr %s781, 8
          %s783 = scalar_lea.vmem [#allocation11], %s782
          %785 = dma.done %s780, 128
        $region76: #{tpu_custom_call.1} parent=71 // pred_fallthru
          _
      $region72: #{tpu_custom_call.1} parent=5 // pred_fallthru
        _
    $region6: #{tpu_custom_call.1} parent=1 // loop_footer
      %s28 = sadd.s32 1, %s24
    $region7: #{tpu_custom_call.1} parent=1 // loop_footer_branch
      %23 = sbr.rel target = $region3
    $region8: #{tpu_custom_call.1} parent=1 // loop_exit
      _
    %786 = vsyncpa [#allocation3], 1
    %s787 = scalar_lea.sflag [#allocation3], 1
    %788 = vsyncpa %s787, 1
    %789 = vsyncpa [#allocation6], 1
    %s790 = scalar_lea.sflag [#allocation6], 1
    %791 = vsyncpa %s790, 1
    %792 = vsyncpa [#allocation9], 1
    %s793 = scalar_lea.sflag [#allocation9], 1
    %794 = vsyncpa %s793, 1
    %795 = vsyncpa [#allocation4], 1
    %s796 = scalar_lea.sflag [#allocation4], 1
    %797 = vsyncpa %s796, 1

</llo_original>
